<compile_context>
chip_gen: v7x
topology: tpu7x:2x2x1
jax: 0.10.0
libtpu: 0.0.40
codegen_flags: <defaults>
</compile_context>

<pallas_src>
import jax
import jax.numpy as jnp
from jax.experimental import pallas as pl
from jax.experimental.pallas import tpu as pltpu


def _ppo_critic_kernel(obs_ref, w_ref, wv_ref, b_ref, out_ref):
    # obs_ref : [tb, D]   bf16  (streamed batch tile)
    # w_ref   : [3, D, D] bf16  (feature_net, hidden0, hidden1; VMEM-resident)
    # wv_ref  : [1, D]    f32   (value-head row; VMEM-resident)
    # b_ref   : [4, D]    f32   (bf, b0, b1, [bv, 0, ...]; VMEM-resident)
    # out_ref : [1, tb]   f32   (lane-dense value row for this tile)
    h = obs_ref[...]  # bf16 — no cast needed for layer 0

    # feature_net (approx) + hidden_layer: 3 x (Linear -> ReLU).
    # bf16 MXU inputs with f32 accumulation; bias add + ReLU in f32 on the VPU
    # (v5e-friendly: no bf16 VPU math needed).
    for layer in range(3):  # static unroll
        h = jnp.dot(h.astype(jnp.bfloat16), w_ref[layer],
                    preferred_element_type=jnp.float32)
        h = jnp.maximum(h + b_ref[layer:layer + 1, :], 0.0)

    # value_net head, computed directly as a lane-dense row:
    #   v[0, b] = sum_d wv[0, d] * h[b, d]   (wv @ h^T, NT dot_general on the MXU).
    # MXU has huge slack at D=32, and this avoids both a lane reduction and a
    # sublane->lane transpose of a [tb, 1] column.  Kept in f32 (head precision).
    v_row = jax.lax.dot_general(
        wv_ref[...], h, (((1,), (1,)), ((), ())),
        preferred_element_type=jnp.float32)            # [1, tb]
    out_ref[...] = (v_row + b_ref[3:4, 0:1]).astype(out_ref.dtype)


def _choose_tile(B, tb_max):
    """Batch tile: as large as possible, lane-/sublane-friendly, >=2 grid steps
    when B is large enough (so v7x's two TensorCores both get work)."""
    if B <= 128:
        return B                                   # single full block
    tb = min(tb_max, max(128, B // 2))             # at least 2 steps if possible
    return (tb // 128) * 128                       # lane-dense out / aligned obs


def _vmem_limit_bytes():
    """~half of physical VMEM: 64 MiB on v5e/v6e (128 MiB), 32 MiB on v7x (64 MiB)."""
    try:
        cap = int(pltpu.get_tpu_info().vmem_capacity_bytes)
        return int(min(96 * 1024 * 1024, max(32 * 1024 * 1024, cap // 2)))
    except Exception:
        return 32 * 1024 * 1024


def ppo_critic_forward(obs, params, *, tb=4096):
    """obs: [B, obs_dim] (f32 or bf16); params from init_params. Returns [B, 1] f32."""
    B, obs_dim = obs.shape
    w_stack = params["w_stack"]   # [3, D, D] bf16
    wv_row = params["wv_row"]     # [1, D]    f32
    b_pack = params["b_pack"]     # [4, D]    f32
    D = w_stack.shape[-1]
    assert obs_dim == D, "packed kernel assumes obs_dim == feature/hidden width"

    # Stream obs as bf16 (ideally the caller already supplies bf16 so this cast
    # fuses upstream / is a no-op); the first MXU matmul truncates anyway.
    if obs.dtype != jnp.bfloat16:
        obs = obs.astype(jnp.bfloat16)

    tb = _choose_tile(B, tb)
    grid = (pl.cdiv(B, tb),)

    resident = dict(pipeline_mode=pl.Buffered(1))  # params: fetched once, 1 buffer
    cost = pl.CostEstimate(
        flops=3 * 2 * B * D * D + 2 * B * D,
        transcendentals=0,
        bytes_accessed=int(B * D * 2            # obs (bf16)
                           + 3 * D * D * 2      # weight stack (bf16)
                           + D * 4 + 4 * D * 4  # value row + biases (f32)
                           + B * 4),            # output (f32)
    )

    out = pl.pallas_call(
        _ppo_critic_kernel,
        out_shape=jax.ShapeDtypeStruct((1, B), jnp.float32),   # lane-dense values
        grid=grid,
        in_specs=[
            pl.BlockSpec((tb, D), lambda i: (i, 0)),           # obs: streamed bf16
            pl.BlockSpec(w_stack.shape, lambda i: (0, 0, 0), **resident),
            pl.BlockSpec(wv_row.shape, lambda i: (0, 0), **resident),
            pl.BlockSpec(b_pack.shape, lambda i: (0, 0), **resident),
        ],
        out_specs=pl.BlockSpec((1, tb), lambda i: (0, i)),
        compiler_params=pltpu.CompilerParams(
            # "parallel" megacore-shards the batch grid on v7x; v5e/v6e: no-op.
            # TODO(synk): if profiling shows one idle v7x core, try CORE_PARALLEL.
            dimension_semantics=("parallel",),
            vmem_limit_bytes=_vmem_limit_bytes(),
        ),
        cost_estimate=cost,
    )(obs, w_stack, wv_row, b_pack)
    return out.reshape(B, 1)


def init_params(key, obs_dim, feature_dim, hidden_dims):
    """PyTorch-default-like uniform init, packed for the kernel."""
    dims = [(obs_dim, feature_dim),
            (feature_dim, hidden_dims[0]),
            (hidden_dims[0], hidden_dims[1]),
            (hidden_dims[1], 1)]
    ws, bs = [], []
    for din, dout in dims:
        key, kw, kb = jax.random.split(key, 3)
        bound = 1.0 / jnp.sqrt(din)
        # Stored pre-transposed as [in, out] so the kernel does x @ W + b.
        ws.append(jax.random.uniform(kw, (din, dout), jnp.float32, -bound, bound))
        bs.append(jax.random.uniform(kb, (dout,), jnp.float32, -bound, bound))

    assert obs_dim == feature_dim == hidden_dims[0] == hidden_dims[1], (
        "packed-weight kernel assumes equal layer widths")
    D = feature_dim

    # NOTE: w_stack could be fp8 on v7x for large D (VMEM pressure); not needed at D=32.
    w_stack = jnp.stack(ws[:3]).astype(jnp.bfloat16)           # [3, D, D] bf16
    wv_row = ws[3].reshape(1, D)                               # [1, D]    f32
    bv_row = jnp.zeros((D,), jnp.float32).at[0].set(bs[3][0])
    b_pack = jnp.stack([bs[0], bs[1], bs[2], bv_row])          # [4, D]    f32

    return {"w_stack": w_stack, "wv_row": wv_row, "b_pack": b_pack,
            "_raw": (ws, bs)}   # f32 copies for the pure-JAX reference


def ref_forward(obs, params):
    """Pure-JAX reference mirroring the kernel's bf16-in / f32-accumulate math."""
    ws, bs = params["_raw"]
    h = obs
    for i in range(3):
        h = jnp.maximum(
            jnp.dot(h.astype(jnp.bfloat16), ws[i].astype(jnp.bfloat16),
                    preferred_element_type=jnp.float32) + bs[i], 0.0)
    return jnp.dot(h, ws[3]) + bs[3]            # f32 value head


if __name__ == "__main__":
    # Small shapes consistent with the module:
    #   obs_dim=32, feature_dim=32, hidden_dims=[32, 32], batch=8
    B, OBS_DIM, FEATURE_DIM = 8, 32, 32
    HIDDEN_DIMS = [32, 32]

    key = jax.random.PRNGKey(0)
    key, k_obs = jax.random.split(key)
    obs = jax.random.normal(k_obs, (B, OBS_DIM), jnp.float32)
    params = init_params(key, OBS_DIM, FEATURE_DIM, HIDDEN_DIMS)

    value = ppo_critic_forward(obs, params)
    value = jax.block_until_ready(value)

    expected = ref_forward(obs, params)
    assert value.shape == (B, 1), value.shape
    assert jnp.allclose(value, expected, atol=1e-3, rtol=1e-3), (
        float(jnp.max(jnp.abs(value - expected))))
    print("KERNEL_OK")
</pallas_src>

<mosaic_0001>
module attributes {stable_mosaic.version = 11 : i64} {
  func.func @_ppo_critic_kernel(%arg0: i32, %arg1: memref<8x32xbf16, #tpu.memory_space<vmem>>, %arg2: memref<3x32x32xbf16, #tpu.memory_space<vmem>>, %arg3: memref<1x32xf32, #tpu.memory_space<vmem>>, %arg4: memref<4x32xf32, #tpu.memory_space<vmem>>, %arg5: memref<1x8xf32, #tpu.memory_space<vmem>>) attributes {dimension_semantics = [#tpu.dimension_semantics<parallel>], iteration_bounds = array<i64: 1>, scalar_prefetch = 0 : i64, scratch_operands = 0 : i64, tpu.core_type = #tpu.core_type<tc>, window_params = [{transform_indices = @transform_0, window_bounds = array<i64: 8, 32>}, {pipeline_mode = #tpu.pipeline_mode<synchronous>, transform_indices = @transform_1, window_bounds = array<i64: 3, 32, 32>}, {pipeline_mode = #tpu.pipeline_mode<synchronous>, transform_indices = @transform_2, window_bounds = array<i64: 1, 32>}, {pipeline_mode = #tpu.pipeline_mode<synchronous>, transform_indices = @transform_3, window_bounds = array<i64: 4, 32>}, {transform_indices = @transform_4, window_bounds = array<i64: 1, 8>}]} {
    %c0 = arith.constant 0 : index
    %c0_0 = arith.constant 0 : index
    %0 = vector.load %arg1[%c0, %c0_0] : memref<8x32xbf16, #tpu.memory_space<vmem>>, vector<8x32xbf16>
    %c0_1 = arith.constant 0 : index
    %c0_2 = arith.constant 0 : index
    %c0_3 = arith.constant 0 : index
    %1 = vector.load %arg2[%c0_1, %c0_2, %c0_3] : memref<3x32x32xbf16, #tpu.memory_space<vmem>>, vector<1x32x32xbf16>
    %2 = vector.shape_cast %1 : vector<1x32x32xbf16> to vector<32x32xbf16>
    %cst = arith.constant dense<0.000000e+00> : vector<8x32xf32>
    %3 = tpu.matmul %0, %2, %cst {dimension_numbers = #tpu.dot_dimension_numbers<[1], [0], [0], [1], [0, 0, 1, 1], [], []>} : vector<8x32xbf16>, vector<32x32xbf16>, vector<8x32xf32> -> vector<8x32xf32>
    %c0_4 = arith.constant 0 : index
    %c0_5 = arith.constant 0 : index
    %4 = vector.load %arg4[%c0_4, %c0_5] : memref<4x32xf32, #tpu.memory_space<vmem>>, vector<1x32xf32>
    %5 = vector.broadcast %4 : vector<1x32xf32> to vector<8x32xf32>
    %6 = arith.addf %3, %5 : vector<8x32xf32>
    %cst_6 = arith.constant 0.000000e+00 : f32
    %7 = vector.broadcast %cst_6 : f32 to vector<8x32xf32>
    %8 = arith.maximumf %6, %7 : vector<8x32xf32>
    %9 = arith.truncf %8 : vector<8x32xf32> to vector<8x32xbf16>
    %c1 = arith.constant 1 : index
    %c0_7 = arith.constant 0 : index
    %c0_8 = arith.constant 0 : index
    %10 = vector.load %arg2[%c1, %c0_7, %c0_8] : memref<3x32x32xbf16, #tpu.memory_space<vmem>>, vector<1x32x32xbf16>
    %11 = vector.shape_cast %10 : vector<1x32x32xbf16> to vector<32x32xbf16>
    %cst_9 = arith.constant dense<0.000000e+00> : vector<8x32xf32>
    %12 = tpu.matmul %9, %11, %cst_9 {dimension_numbers = #tpu.dot_dimension_numbers<[1], [0], [0], [1], [0, 0, 1, 1], [], []>} : vector<8x32xbf16>, vector<32x32xbf16>, vector<8x32xf32> -> vector<8x32xf32>
    %c1_10 = arith.constant 1 : index
    %c0_11 = arith.constant 0 : index
    %13 = vector.load %arg4[%c1_10, %c0_11] : memref<4x32xf32, #tpu.memory_space<vmem>>, vector<1x32xf32>
    %14 = vector.broadcast %13 : vector<1x32xf32> to vector<8x32xf32>
    %15 = arith.addf %12, %14 : vector<8x32xf32>
    %cst_12 = arith.constant 0.000000e+00 : f32
    %16 = vector.broadcast %cst_12 : f32 to vector<8x32xf32>
    %17 = arith.maximumf %15, %16 : vector<8x32xf32>
    %18 = arith.truncf %17 : vector<8x32xf32> to vector<8x32xbf16>
    %c2 = arith.constant 2 : index
    %c0_13 = arith.constant 0 : index
    %c0_14 = arith.constant 0 : index
    %19 = vector.load %arg2[%c2, %c0_13, %c0_14] : memref<3x32x32xbf16, #tpu.memory_space<vmem>>, vector<1x32x32xbf16>
    %20 = vector.shape_cast %19 : vector<1x32x32xbf16> to vector<32x32xbf16>
    %cst_15 = arith.constant dense<0.000000e+00> : vector<8x32xf32>
    %21 = tpu.matmul %18, %20, %cst_15 {dimension_numbers = #tpu.dot_dimension_numbers<[1], [0], [0], [1], [0, 0, 1, 1], [], []>} : vector<8x32xbf16>, vector<32x32xbf16>, vector<8x32xf32> -> vector<8x32xf32>
    %c2_16 = arith.constant 2 : index
    %c0_17 = arith.constant 0 : index
    %22 = vector.load %arg4[%c2_16, %c0_17] : memref<4x32xf32, #tpu.memory_space<vmem>>, vector<1x32xf32>
    %23 = vector.broadcast %22 : vector<1x32xf32> to vector<8x32xf32>
    %24 = arith.addf %21, %23 : vector<8x32xf32>
    %cst_18 = arith.constant 0.000000e+00 : f32
    %25 = vector.broadcast %cst_18 : f32 to vector<8x32xf32>
    %26 = arith.maximumf %24, %25 : vector<8x32xf32>
    %c0_19 = arith.constant 0 : index
    %c0_20 = arith.constant 0 : index
    %27 = vector.load %arg3[%c0_19, %c0_20] : memref<1x32xf32, #tpu.memory_space<vmem>>, vector<1x32xf32>
    %cst_21 = arith.constant dense<0.000000e+00> : vector<1x8xf32>
    %28 = tpu.matmul %27, %26, %cst_21 {dimension_numbers = #tpu.dot_dimension_numbers<[1], [1], [0], [0], [0, 0, 1, 0], [], []>} : vector<1x32xf32>, vector<8x32xf32>, vector<1x8xf32> -> vector<1x8xf32>
    %c3 = arith.constant 3 : index
    %c0_22 = arith.constant 0 : index
    %29 = vector.load %arg4[%c3, %c0_22] : memref<4x32xf32, #tpu.memory_space<vmem>>, vector<1x1xf32>
    %30 = vector.broadcast %29 : vector<1x1xf32> to vector<1x8xf32>
    %31 = arith.addf %28, %30 : vector<1x8xf32>
    %c0_23 = arith.constant 0 : index
    %c0_24 = arith.constant 0 : index
    %32 = vector.load %arg5[%c0_23, %c0_24] : memref<1x8xf32, #tpu.memory_space<vmem>>, vector<1x8xf32>
    tpu.vector_store %arg5[%c0_23, %c0_24], %31 {strides = array<i32>} : memref<1x8xf32, #tpu.memory_space<vmem>>, vector<1x8xf32>,
    return
  }
  func.func @transform_0(%arg0: i32) -> (i32, i32) {
    %c0_i32 = arith.constant 0 : i32
    %c0_i32_0 = arith.constant 0 : i32
    return %arg0, %c0_i32 : i32, i32
  }
  func.func @transform_1(%arg0: i32) -> (i32, i32, i32) {
    %c0_i32 = arith.constant 0 : i32
    %c0_i32_0 = arith.constant 0 : i32
    %c0_i32_1 = arith.constant 0 : i32
    %c0_i32_2 = arith.constant 0 : i32
    return %c0_i32, %c0_i32_0, %c0_i32_1 : i32, i32, i32
  }
  func.func @transform_2(%arg0: i32) -> (i32, i32) {
    %c0_i32 = arith.constant 0 : i32
    %c0_i32_0 = arith.constant 0 : i32
    %c0_i32_1 = arith.constant 0 : i32
    return %c0_i32, %c0_i32_0 : i32, i32
  }
  func.func @transform_3(%arg0: i32) -> (i32, i32) {
    %c0_i32 = arith.constant 0 : i32
    %c0_i32_0 = arith.constant 0 : i32
    %c0_i32_1 = arith.constant 0 : i32
    return %c0_i32, %c0_i32_0 : i32, i32
  }
  func.func @transform_4(%arg0: i32) -> (i32, i32) {
    %c0_i32 = arith.constant 0 : i32
    %c0_i32_0 = arith.constant 0 : i32
    return %c0_i32, %arg0 : i32, i32
  }
}

</mosaic_0001>

<llo_original>
// kernel: tpu_custom_call.1
$region0: #{tpu_custom_call.1}
  #allocation0 [shape = 'u32[]', space=smem, size = 0x4, offset = 0x4, fixed_abs, tag = 'smem constant byte address 0x4 - core index']
  #allocation1 [shape = 'u32[144,128]{1,0:T(1,128)}', space=vmem, size = 0x12000, scoped, tag = 'internal scratch']
  %s0 = inlined_call_operand.hbm [shape: bf16[8,32], index: 0, kind: input, shape index: {}]
  %s1 = inlined_call_operand.hbm [shape: bf16[3,32,32], index: 1, kind: input, shape index: {}]
  %s2 = inlined_call_operand.vmem [shape: f32[1,32], index: 2, kind: input, shape index: {}]
  %s3 = inlined_call_operand.vmem [shape: f32[4,32], index: 3, kind: input, shape index: {}]
  %s4 = inlined_call_operand.hbm [shape: f32[1,8], index: 4, kind: output, shape index: {}]
  %s5 = sld [smem:[#allocation0]]
  $region34: #{tpu_custom_call.1} parent=0
    _
  %s7 = ssub.s32 1, %s5
  %s8 = scalar_select 0, %s7, %s5
  $region1: #{tpu_custom_call.1} parent=0
    #allocation2 [shape = 'u8[2048]{0}', space=vmem, size = 0x800, scoped, tag = 'input window, operand 0, single buffered']
    #allocation3 [shape = 's32[1]{0}', space=sflag, size = 0x4, scoped, tag = 'scoped memory for tpu_custom_call.1']
    #allocation4 [shape = 's32[1]{0}', space=sflag, size = 0x4, scoped, tag = 'scoped memory for tpu_custom_call.1']
    #allocation5 [shape = 'u8[24576]{0}', space=vmem, size = 0x6000, scoped, tag = 'input window, operand 1, single buffered']
    #allocation6 [shape = 's32[1]{0}', space=sflag, size = 0x4, scoped, tag = 'scoped memory for tpu_custom_call.1']
    #allocation7 [shape = 'u8[512]{0}', space=vmem, size = 0x400, scoped, tag = 'output window, operand 0, single buffered']
    %9 = vsyncpa [#allocation3], 0
    %10 = vsyncpa [#allocation6], 0
    %11 = vsyncpa [#allocation4], 0
    // Predicated region
    $region2: #{tpu_custom_call.1} parent=1 // pred_check
      _
    $region3: #{tpu_custom_call.1} parent=1 // pred_check_branch
      %13 = sbr.rel (0) target = $region5
    $region4: #{tpu_custom_call.1} parent=1 // pred_region
      %s15 = ssub.s32 64, 64
      %16 = vsyncadd [#allocation3], %s15
      %s18 = sshll.u32 [#allocation2], 4
      %s19 = int_to_ptr.vmem [resolvable:$true] %s18
      %21 = dma.hbm_to_vmem [thread:$0]  %s0, 64, %s19, [#allocation3]
    $region5: #{tpu_custom_call.1} parent=1 // pred_fallthru
      _
    // Predicated region
    $region6: #{tpu_custom_call.1} parent=1 // pred_check
      _
    $region7: #{tpu_custom_call.1} parent=1 // pred_check_branch
      %23 = sbr.rel (0) target = $region9
    $region8: #{tpu_custom_call.1} parent=1 // pred_region
      %s25 = ssub.s32 768, 768
      %26 = vsyncadd [#allocation6], %s25
      %s27 = sshll.u32 [#allocation5], 4
      %s28 = int_to_ptr.vmem [resolvable:$true] %s27
      %33 = dma.hbm_to_vmem [thread:$0]  %s1, 768, %s28, [#allocation6], 64, 64, 4
    $region9: #{tpu_custom_call.1} parent=1 // pred_fallthru
      _
    // Predicated region
    $region10: #{tpu_custom_call.1} parent=1 // pred_check
      _
    $region11: #{tpu_custom_call.1} parent=1 // pred_check_branch
      %35 = sbr.rel (0) target = $region13
    $region12: #{tpu_custom_call.1} parent=1 // pred_region
      _
    $region13: #{tpu_custom_call.1} parent=1 // pred_fallthru
      _
    // Predicated region
    $region14: #{tpu_custom_call.1} parent=1 // pred_check
      _
    $region15: #{tpu_custom_call.1} parent=1 // pred_check_branch
      %37 = sbr.rel (0) target = $region17
    $region16: #{tpu_custom_call.1} parent=1 // pred_region
      _
    $region17: #{tpu_custom_call.1} parent=1 // pred_fallthru
      _
    // Predicated region
    $region18: #{tpu_custom_call.1} parent=1 // pred_check
      _
    $region19: #{tpu_custom_call.1} parent=1 // pred_check_branch
      %39 = sbr.rel (0) target = $region21
    $region20: #{tpu_custom_call.1} parent=1 // pred_region
      %40 = dma.done [#allocation3], 64
    $region21: #{tpu_custom_call.1} parent=1 // pred_fallthru
      _
    // Predicated region
    $region22: #{tpu_custom_call.1} parent=1 // pred_check
      _
    $region23: #{tpu_custom_call.1} parent=1 // pred_check_branch
      %42 = sbr.rel (0) target = $region25
    $region24: #{tpu_custom_call.1} parent=1 // pred_region
      %43 = dma.done [#allocation6], 768
    $region25: #{tpu_custom_call.1} parent=1 // pred_fallthru
      _
    %v45 = vld [vmem:[#allocation2] sm:$0xf]
    %v46 = vld [vmem:[#allocation5] sm:$0xf]
    %v47 = vld [vmem:[#allocation5 + $0x4] sm:$0xf]
    %v48 = vld [vmem:[#allocation5 + $0x8] sm:$0xf]
    %v49 = vld [vmem:[#allocation5 + $0xc] sm:$0xf]
    %v50 = vld [vmem:[%s3] sm:$0x1]
    %v51 = vlaneseq
    %v52 = vshrl.u32 %v51, 7
    %v53 = vsub.s32 0, %v52
    %v54 = vrot.slane %v50, %v53
    %v59 = vunpack.c.l.b16 %v46
    %v60 = vunpack.c.l.b16 %v47
    %v61 = vunpack.c.l.b16 %v48
    %v62 = vunpack.c.l.b16 %v49
    %v63 = vpack.c.b16 %v60, %v59
    %v64 = vpack.c.b16 %v62, %v61
    %vm67 = vcmask 261120
    %v69 = vsel %vm67, %v45, 0
    %71 = vmatprep.subr.bf16.mxu0 0
    %72 = vmatpush1.bf16.msra.mxu0 %v63
    %73 = vmatprep.subr.bf16.mxu0 0
    %74 = vmatpush1.bf16.msra.mxu0 %v64
    %75 = vmatprep.subr.bf16.mxu0 0
    %76 = vmatpush1.bf16.msra.mxu0 0
    %77 = vmatprep.subr.bf16.mxu0 0
    %78 = vmatpush1.bf16.msra.mxu0 0
    %79 = vmatprep.subr.bf16.mxu0 0
    %80 = vmatpush1.bf16.msra.mxu0 0
    %81 = vmatprep.subr.bf16.mxu0 0
    %82 = vmatpush1.bf16.msra.mxu0 0
    %83 = vmatprep.subr.bf16.mxu0 0
    %84 = vmatpush1.bf16.msra.mxu0 0
    %85 = vmatprep.subr.bf16.mxu0 0
    %86 = vmatpush1.bf16.msra.mxu0 0
    %87 = vmatprep.subr.bf16.mxu0 0
    %88 = vmatpush1.bf16.msra.mxu0 0
    %89 = vmatprep.subr.bf16.mxu0 0
    %90 = vmatpush1.bf16.msra.mxu0 0
    %91 = vmatprep.subr.bf16.mxu0 0
    %92 = vmatpush1.bf16.msra.mxu0 0
    %93 = vmatprep.subr.bf16.mxu0 0
    %94 = vmatpush1.bf16.msra.mxu0 0
    %95 = vmatprep.subr.bf16.mxu0 0
    %96 = vmatpush1.bf16.msra.mxu0 0
    %97 = vmatprep.subr.bf16.mxu0 0
    %98 = vmatpush1.bf16.msra.mxu0 0
    %99 = vmatprep.subr.bf16.mxu0 0
    %100 = vmatpush1.bf16.msra.mxu0 0
    %101 = vmatprep.subr.bf16.mxu0 0
    %102 = vmatpush1.bf16.msra.mxu0 0
    %103 = vmatprep.mubr.bf16.mxu0 0
    %104 = vmatmul.mubr.bf16.gmra.mrb[0].mxu0 %v69
    %v105 = vpop.f32.mrb[0].mxu0
    %v106 = vadd.f32 %v54, %v105
    %v107 = vpop.f32.mrb[0].mxu0
    %v108 = vpop.f32.mrb[0].mxu0
    %v109 = vpop.f32.mrb[0].mxu0
    %110 = vdwg.mxu0
    %v111 = vmax.f32 %v106, 0.0
    %v112 = vpack.c.bf16 %v111, %v111
    %s113 = scalar_lea.vmem [#allocation5], 16
    %v114 = vld [vmem:[%s113] sm:$0xf]
    %v115 = vld [vmem:[%s113 + $0x4] sm:$0xf]
    %v116 = vld [vmem:[%s113 + $0x8] sm:$0xf]
    %v117 = vld [vmem:[%s113 + $0xc] sm:$0xf]
    %v118 = vld [vmem:[%s3 + $0x1] sm:$0x1]
    %v119 = vlaneseq
    %v120 = vshrl.u32 %v119, 7
    %v121 = vsub.s32 0, %v120
    %v122 = vrot.slane %v118, %v121
    %v127 = vunpack.c.l.b16 %v114
    %v128 = vunpack.c.l.b16 %v115
    %v129 = vunpack.c.l.b16 %v116
    %v130 = vunpack.c.l.b16 %v117
    %v131 = vpack.c.b16 %v128, %v127
    %v132 = vpack.c.b16 %v130, %v129
    %v136 = vsel %vm67, %v112, 0
    %138 = vmatprep.subr.bf16.mxu0 0
    %139 = vmatpush1.bf16.msra.mxu0 %v131
    %140 = vmatprep.subr.bf16.mxu0 0
    %141 = vmatpush1.bf16.msra.mxu0 %v132
    %142 = vmatprep.subr.bf16.mxu0 0
    %143 = vmatpush1.bf16.msra.mxu0 0
    %144 = vmatprep.subr.bf16.mxu0 0
    %145 = vmatpush1.bf16.msra.mxu0 0
    %146 = vmatprep.subr.bf16.mxu0 0
    %147 = vmatpush1.bf16.msra.mxu0 0
    %148 = vmatprep.subr.bf16.mxu0 0
    %149 = vmatpush1.bf16.msra.mxu0 0
    %150 = vmatprep.subr.bf16.mxu0 0
    %151 = vmatpush1.bf16.msra.mxu0 0
    %152 = vmatprep.subr.bf16.mxu0 0
    %153 = vmatpush1.bf16.msra.mxu0 0
    %154 = vmatprep.subr.bf16.mxu0 0
    %155 = vmatpush1.bf16.msra.mxu0 0
    %156 = vmatprep.subr.bf16.mxu0 0
    %157 = vmatpush1.bf16.msra.mxu0 0
    %158 = vmatprep.subr.bf16.mxu0 0
    %159 = vmatpush1.bf16.msra.mxu0 0
    %160 = vmatprep.subr.bf16.mxu0 0
    %161 = vmatpush1.bf16.msra.mxu0 0
    %162 = vmatprep.subr.bf16.mxu0 0
    %163 = vmatpush1.bf16.msra.mxu0 0
    %164 = vmatprep.subr.bf16.mxu0 0
    %165 = vmatpush1.bf16.msra.mxu0 0
    %166 = vmatprep.subr.bf16.mxu0 0
    %167 = vmatpush1.bf16.msra.mxu0 0
    %168 = vmatprep.subr.bf16.mxu0 0
    %169 = vmatpush1.bf16.msra.mxu0 0
    %170 = vmatprep.mubr.bf16.mxu0 0
    %171 = vmatmul.mubr.bf16.gmra.mrb[0].mxu0 %v136
    %v172 = vpop.f32.mrb[0].mxu0
    %v173 = vadd.f32 %v122, %v172
    %v174 = vpop.f32.mrb[0].mxu0
    %v175 = vpop.f32.mrb[0].mxu0
    %v176 = vpop.f32.mrb[0].mxu0
    %177 = vdwg.mxu0
    %v178 = vmax.f32 %v173, 0.0
    %v179 = vpack.c.bf16 %v178, %v178
    %s180 = scalar_lea.vmem [#allocation5], 32
    %v181 = vld [vmem:[%s180] sm:$0xf]
    %v182 = vld [vmem:[%s180 + $0x4] sm:$0xf]
    %v183 = vld [vmem:[%s180 + $0x8] sm:$0xf]
    %v184 = vld [vmem:[%s180 + $0xc] sm:$0xf]
    %v185 = vld [vmem:[%s3 + $0x2] sm:$0x1]
    %v186 = vlaneseq
    %v187 = vshrl.u32 %v186, 7
    %v188 = vsub.s32 0, %v187
    %v189 = vrot.slane %v185, %v188
    %v194 = vunpack.c.l.b16 %v181
    %v195 = vunpack.c.l.b16 %v182
    %v196 = vunpack.c.l.b16 %v183
    %v197 = vunpack.c.l.b16 %v184
    %v198 = vpack.c.b16 %v195, %v194
    %v199 = vpack.c.b16 %v197, %v196
    %v203 = vsel %vm67, %v179, 0
    %205 = vmatprep.subr.bf16.mxu0 0
    %206 = vmatpush1.bf16.msra.mxu0 %v198
    %207 = vmatprep.subr.bf16.mxu0 0
    %208 = vmatpush1.bf16.msra.mxu0 %v199
    %209 = vmatprep.subr.bf16.mxu0 0
    %210 = vmatpush1.bf16.msra.mxu0 0
    %211 = vmatprep.subr.bf16.mxu0 0
    %212 = vmatpush1.bf16.msra.mxu0 0
    %213 = vmatprep.subr.bf16.mxu0 0
    %214 = vmatpush1.bf16.msra.mxu0 0
    %215 = vmatprep.subr.bf16.mxu0 0
    %216 = vmatpush1.bf16.msra.mxu0 0
    %217 = vmatprep.subr.bf16.mxu0 0
    %218 = vmatpush1.bf16.msra.mxu0 0
    %219 = vmatprep.subr.bf16.mxu0 0
    %220 = vmatpush1.bf16.msra.mxu0 0
    %221 = vmatprep.subr.bf16.mxu0 0
    %222 = vmatpush1.bf16.msra.mxu0 0
    %223 = vmatprep.subr.bf16.mxu0 0
    %224 = vmatpush1.bf16.msra.mxu0 0
    %225 = vmatprep.subr.bf16.mxu0 0
    %226 = vmatpush1.bf16.msra.mxu0 0
    %227 = vmatprep.subr.bf16.mxu0 0
    %228 = vmatpush1.bf16.msra.mxu0 0
    %229 = vmatprep.subr.bf16.mxu0 0
    %230 = vmatpush1.bf16.msra.mxu0 0
    %231 = vmatprep.subr.bf16.mxu0 0
    %232 = vmatpush1.bf16.msra.mxu0 0
    %233 = vmatprep.subr.bf16.mxu0 0
    %234 = vmatpush1.bf16.msra.mxu0 0
    %235 = vmatprep.subr.bf16.mxu0 0
    %236 = vmatpush1.bf16.msra.mxu0 0
    %237 = vmatprep.mubr.bf16.mxu0 0
    %238 = vmatmul.mubr.bf16.gmra.mrb[0].mxu0 %v203
    %v239 = vpop.f32.mrb[0].mxu0
    %v240 = vadd.f32 %v189, %v239
    %v241 = vpop.f32.mrb[0].mxu0
    %v242 = vpop.f32.mrb[0].mxu0
    %v243 = vpop.f32.mrb[0].mxu0
    %244 = vdwg.mxu0
    %v245 = vmax.f32 %v240, 0.0
    %v246 = vld [vmem:[%s2] sm:$0x1]
    %v247 = vld [vmem:[%s3 + $0x3] sm:$0x1]
    %249 = vset.pattern.permute.xlu0 0
    %250 = vperm.xlu0 %249, %v247
    %v251 = vpop.permute.xlu0 %250
    %v254 = vsel %vm67, %v246, 0
    %v257 = vsel %vm67, %v245, 0
    %259 = vmatprep.subr.mxu0 0.0
    %260 = vmatpush1.xpose.msra.mxu0 %v257
    %261 = vmatprep.subr.mxu0 0.0
    %262 = vmatpush1.xpose.msra.mxu0 0.0
    %263 = vmatprep.subr.mxu0 0.0
    %264 = vmatpush1.xpose.msra.mxu0 0.0
    %265 = vmatprep.subr.mxu0 0.0
    %266 = vmatpush1.xpose.msra.mxu0 0.0
    %267 = vmatprep.subr.mxu0 0.0
    %268 = vmatpush1.xpose.msra.mxu0 0.0
    %269 = vmatprep.subr.mxu0 0.0
    %270 = vmatpush1.xpose.msra.mxu0 0.0
    %271 = vmatprep.subr.mxu0 0.0
    %272 = vmatpush1.xpose.msra.mxu0 0.0
    %273 = vmatprep.subr.mxu0 0.0
    %274 = vmatpush1.xpose.msra.mxu0 0.0
    %275 = vmatprep.subr.mxu0 0.0
    %276 = vmatpush1.xpose.msra.mxu0 0.0
    %277 = vmatprep.subr.mxu0 0.0
    %278 = vmatpush1.xpose.msra.mxu0 0.0
    %279 = vmatprep.subr.mxu0 0.0
    %280 = vmatpush1.xpose.msra.mxu0 0.0
    %281 = vmatprep.subr.mxu0 0.0
    %282 = vmatpush1.xpose.msra.mxu0 0.0
    %283 = vmatprep.subr.mxu0 0.0
    %284 = vmatpush1.xpose.msra.mxu0 0.0
    %285 = vmatprep.subr.mxu0 0.0
    %286 = vmatpush1.xpose.msra.mxu0 0.0
    %287 = vmatprep.subr.mxu0 0.0
    %288 = vmatpush1.xpose.msra.mxu0 0.0
    %289 = vmatprep.subr.mxu0 0.0
    %290 = vmatpush1.xpose.msra.mxu0 0.0
    %291 = vmatprep.subr.mxu0 0.0
    %292 = vmatpush1.xpose.msra.mxu0 0.0
    %293 = vmatprep.subr.mxu0 0.0
    %294 = vmatpush1.xpose.msra.mxu0 0.0
    %295 = vmatprep.subr.mxu0 0.0
    %296 = vmatpush1.xpose.msra.mxu0 0.0
    %297 = vmatprep.subr.mxu0 0.0
    %298 = vmatpush1.xpose.msra.mxu0 0.0
    %299 = vmatprep.subr.mxu0 0.0
    %300 = vmatpush1.xpose.msra.mxu0 0.0
    %301 = vmatprep.subr.mxu0 0.0
    %302 = vmatpush1.xpose.msra.mxu0 0.0
    %303 = vmatprep.subr.mxu0 0.0
    %304 = vmatpush1.xpose.msra.mxu0 0.0
    %305 = vmatprep.subr.mxu0 0.0
    %306 = vmatpush1.xpose.msra.mxu0 0.0
    %307 = vmatprep.subr.mxu0 0.0
    %308 = vmatpush1.xpose.msra.mxu0 0.0
    %309 = vmatprep.subr.mxu0 0.0
    %310 = vmatpush1.xpose.msra.mxu0 0.0
    %311 = vmatprep.subr.mxu0 0.0
    %312 = vmatpush1.xpose.msra.mxu0 0.0
    %313 = vmatprep.subr.mxu0 0.0
    %314 = vmatpush1.xpose.msra.mxu0 0.0
    %315 = vmatprep.subr.mxu0 0.0
    %316 = vmatpush1.xpose.msra.mxu0 0.0
    %317 = vmatprep.subr.mxu0 0.0
    %318 = vmatpush1.xpose.msra.mxu0 0.0
    %319 = vmatprep.subr.mxu0 0.0
    %320 = vmatpush1.xpose.msra.mxu0 0.0
    %321 = vmatprep.subr.mxu0 0.0
    %322 = vmatpush1.xpose.msra.mxu0 0.0
    %323 = vmatprep.mubr.f32.mxu0 0.0
    %324 = vmatmul.mubr.f32.gmra.mrb[0].mxu0 %v254
    %v325 = vpop.f32.mrb[0].mxu0
    %v326 = vadd.f32 %v251, %v325
    %v327 = vpop.f32.mrb[0].mxu0
    %328 = vdwg.mxu0
    %vm329 = vcmask 57344
    %330 = vst.msk [vmem:[#allocation7] sm:$0x1] %vm329, %v326
    // Predicated region
    $region26: #{tpu_custom_call.1} parent=1 // pred_check
      _
    $region27: #{tpu_custom_call.1} parent=1 // pred_check_branch
      %332 = sbr.rel (0) target = $region29
    $region28: #{tpu_custom_call.1} parent=1 // pred_region
      %s334 = ssub.s32 16, 16
      %335 = vsyncadd [#allocation4], %s334
      %s337 = sshll.u32 [#allocation7], 4
      %s338 = int_to_ptr.vmem [resolvable:$true] %s337
      %340 = dma.vmem_to_hbm [thread:$0]  %s338, 16, %s4, [#allocation4]
    $region29: #{tpu_custom_call.1} parent=1 // pred_fallthru
      _
    // Predicated region
    $region30: #{tpu_custom_call.1} parent=1 // pred_check
      _
    $region31: #{tpu_custom_call.1} parent=1 // pred_check_branch
      %342 = sbr.rel (0) target = $region33
    $region32: #{tpu_custom_call.1} parent=1 // pred_region
      %343 = dma.done [#allocation4], 16
    $region33: #{tpu_custom_call.1} parent=1 // pred_fallthru
      _
    %344 = vsyncpa [#allocation3], 1
    %345 = vsyncpa [#allocation6], 1
    %346 = vsyncpa [#allocation4], 1

</llo_original>
